<compile_context>
chip_gen: v6e
topology: v6e:2x2x1
jax: 0.10.0
libtpu: 0.0.40
codegen_flags: <defaults>
</compile_context>

<pallas_src>
import functools

import jax
import jax.numpy as jnp
from jax.experimental import pallas as pl
from jax.experimental.pallas import tpu as pltpu


def _round_up(x: int, m: int) -> int:
    return (x + m - 1) // m * m


def _embedding_kernel(ids_ref, table_ref, out_ref):
    # ids_ref:   (TN, 1)  int32  token ids for this token tile
    # table_ref: (TV, D)  f32    one vocab tile of the table (native width D)
    # out_ref:   (TN, Dp) f32    output tile; VMEM-resident across the vocab
    #                            (reduction) axis and used as the accumulator.
    k = pl.program_id(1)
    tn = ids_ref.shape[0]
    tv, d = table_ref.shape

    @pl.when(k == 0)
    def _():
        out_ref[...] = jnp.zeros_like(out_ref)

    # Shift ids into this vocab tile's local coordinates (cheap (TN,1) op) and
    # compare against a plain lane iota: exact 0/1 one-hot.  Ids outside this
    # tile (negative or >= TV after the shift) never match -> exact zeros.
    ids_local = ids_ref[...] - k * tv                        # (TN, 1) int32
    col = jax.lax.broadcasted_iota(jnp.int32, (tn, tv), 1)   # (TN, TV)
    onehot = (col == ids_local).astype(jnp.float32)

    # MXU gather: (TN, TV) @ (TV, D) -> (TN, D), f32 accumulation.
    part = jnp.dot(onehot, table_ref[...], preferred_element_type=jnp.float32)

    if d == out_ref.shape[1]:
        out_ref[...] += part
    else:
        # Lane-masked in-VMEM accumulate into the first D lanes; the padded
        # lanes stay exactly zero (zeroed at k == 0) and are sliced off by the
        # wrapper, so the HBM writeback of the block remains lane-dense.
        out_ref[:, :d] += part


def prepare_table(table, *, vocab_tile=1024):
    """Pad the table's vocab axis ONCE (outside the per-call jitted path).

    Padded rows are exact zeros; they are never selected by in-range ids.
    Must be called with the same `vocab_tile` later passed to the forward.
    """
    V, _ = table.shape
    TV = _round_up(min(vocab_tile, V), 128)
    Vp = _round_up(V, TV)
    return jnp.pad(table, ((0, Vp - V), (0, 0)))


@functools.partial(jax.jit, static_argnames=("token_tile", "vocab_tile"))
def gensim_embedding_forward(input_ids, table_p, *, token_tile=256, vocab_tile=1024):
    """Pallas embedding lookup (forward of GensimEmbedding).

    input_ids: (B, S) integer ids, expected in [0, V).  Out-of-range /
               negative ids yield an all-zero row (torch.nn.Embedding raises).
    table_p:   (Vp, D) float32 table with the vocab axis pre-padded by
               prepare_table() using the SAME vocab_tile ([PAD] row zero).
    returns:   (B, S, D) float32
    """
    B, S = input_ids.shape
    Vp, D = table_p.shape
    N = B * S

    # --- tile geometry (MXU / lane aligned) --------------------------------
    TV = _round_up(min(vocab_tile, Vp), 128)
    if Vp % TV != 0:
        raise ValueError(
            "table_p vocab padding does not match vocab_tile; pad with "
            "prepare_table(table, vocab_tile=...) using the same vocab_tile."
        )
    # Clamp the token tile to the real problem size ...
    TN = min(_round_up(token_tile, 128), _round_up(N, 128))
    # ... but keep >= 2 token tiles when possible so the 'parallel' axis can
    # be sharded across both v7x TensorCores (no effect on v5e / v6e).
    if TN > 128:
        TN = min(TN, max(128, _round_up(pl.cdiv(N, 2), 128)))
    Np = _round_up(N, TN)
    Dp = _round_up(D, 128)            # lane-dense output writeback width

    flat_ids = input_ids.reshape(-1).astype(jnp.int32)
    # Padded token slots reuse id 0 (they gather a real row) and are sliced
    # off below via [:N]; keep that slice if this output is ever aliased.
    ids_col = jnp.pad(flat_ids, (0, Np - N)).reshape(Np, 1)

    grid = (Np // TN, Vp // TV)       # (token tiles, vocab tiles) - reduction last

    out = pl.pallas_call(
        _embedding_kernel,
        out_shape=jax.ShapeDtypeStruct((Np, Dp), table_p.dtype),
        grid_spec=pltpu.PrefetchScalarGridSpec(
            num_scalar_prefetch=0,
            grid=grid,
            in_specs=[
                # Per-token-tile ids; constant across the vocab (reduction) axis.
                pl.BlockSpec((TN, 1), lambda i, k: (i, 0)),
                # Streamed vocab tile of the table at its native width D.
                pl.BlockSpec((TV, D), lambda i, k: (k, 0)),
            ],
            # Output block index constant across k -> VMEM-resident accumulator.
            out_specs=pl.BlockSpec((TN, Dp), lambda i, k: (i, 0)),
        ),
        compiler_params=pltpu.CompilerParams(
            # Token axis parallel (megacore-shardable), vocab axis is the reduction.
            dimension_semantics=("parallel", "arbitrary"),
            # Actual footprint with defaults is ~1-2 MiB (double-buffered ids +
            # table tile + output block); 32 MiB respects every generation's
            # scoped budget including v7x's 64 MiB physical VMEM.
            vmem_limit_bytes=32 * 1024 * 1024,
        ),
    )(ids_col, table_p)

    return out[:N, :D].reshape(B, S, D)


def make_embedding_table(key, vocab_size, emb_dim, pad_id):
    """Deterministic stand-in for the gensim-initialized table.

    Mirrors the module's fallback init (uniform in [-0.5, 0.5]) and zeroes the
    [PAD] row, as GensimEmbedding.initial_emb does.
    """
    table = jax.random.uniform(
        key, (vocab_size, emb_dim), minval=-0.5, maxval=0.5, dtype=jnp.float32
    )
    table = table.at[pad_id].set(0.0)
    return table


if __name__ == "__main__":
    key = jax.random.PRNGKey(0)
    k_tab, k_ids = jax.random.split(key)

    # Small synthetic vocab; emb_dim = 50 to match 'glove-wiki-gigaword-50'.
    VOCAB_SIZE = 64
    EMB_DIM = 50
    PAD_ID = 0
    B, S = 2, 8

    table = make_embedding_table(k_tab, VOCAB_SIZE, EMB_DIM, PAD_ID)
    # Pad the vocab axis once, outside the per-call path (perf review item).
    table_p = prepare_table(table)

    input_ids = jax.random.randint(k_ids, (B, S), 0, VOCAB_SIZE, dtype=jnp.int32)
    # Make sure a PAD token appears so the zero-row path is exercised.
    input_ids = input_ids.at[0, 0].set(PAD_ID)

    out = gensim_embedding_forward(input_ids, table_p)
    out = jax.block_until_ready(out)

    # Reference: plain JAX gather (same semantics as nn.Embedding forward).
    ref = jnp.take(table, input_ids, axis=0)
    assert out.shape == (B, S, EMB_DIM), out.shape
    assert out.dtype == jnp.float32
    # Row selection is exact (0/1 one-hot); the tolerance only covers the
    # MXU's f32-operand handling (default matmul precision may round the
    # table operand to bf16, <= ~1e-3 absolute for values in [-0.5, 0.5]).
    assert jnp.allclose(out, ref, atol=5e-3), "mismatch vs reference gather"
    assert jnp.all(out[0, 0] == 0.0), "PAD row must be zero"

    print("KERNEL_OK")
</pallas_src>

<mosaic_0001>
module attributes {stable_mosaic.version = 11 : i64} {
  func.func @_embedding_kernel(%arg0: i32, %arg1: i32, %arg2: memref<128x1xi32, #tpu.memory_space<vmem>>, %arg3: memref<128x50xf32, #tpu.memory_space<vmem>>, %arg4: memref<128x128xf32, #tpu.memory_space<vmem>>) attributes {dimension_semantics = [#tpu.dimension_semantics<parallel>, #tpu.dimension_semantics<arbitrary>], iteration_bounds = array<i64: 1, 1>, scalar_prefetch = 0 : i64, scratch_operands = 0 : i64, tpu.core_type = #tpu.core_type<tc>, window_params = [{transform_indices = @transform_0, window_bounds = array<i64: 128, 1>}, {transform_indices = @transform_1, window_bounds = array<i64: 128, 50>}, {transform_indices = @transform_2, window_bounds = array<i64: 128, 128>}]} {
    %c0_i32 = arith.constant 0 : i32
    %0 = arith.cmpi eq, %arg1, %c0_i32 : i32
    %1 = arith.extui %0 : i1 to i32
    %c0_i32_0 = arith.constant 0 : i32
    %2 = arith.cmpi ne, %1, %c0_i32_0 : i32
    scf.if %2 {
      %cst_8 = arith.constant 0.000000e+00 : f32
      %17 = vector.broadcast %cst_8 : f32 to vector<128x128xf32>
      %c0_9 = arith.constant 0 : index
      %c0_10 = arith.constant 0 : index
      %18 = vector.load %arg4[%c0_9, %c0_10] : memref<128x128xf32, #tpu.memory_space<vmem>>, vector<128x128xf32>
      tpu.vector_store %arg4[%c0_9, %c0_10], %17 {strides = array<i32>} : memref<128x128xf32, #tpu.memory_space<vmem>>, vector<128x128xf32>,
    } else {
    }
    %c0 = arith.constant 0 : index
    %c0_1 = arith.constant 0 : index
    %3 = vector.load %arg2[%c0, %c0_1] : memref<128x1xi32, #tpu.memory_space<vmem>>, vector<128x1xi32>
    %c128_i32 = arith.constant 128 : i32
    %4 = arith.muli %arg1, %c128_i32 : i32
    %5 = vector.broadcast %4 : i32 to vector<128x1xi32>
    %6 = arith.subi %3, %5 : vector<128x1xi32>
    %7 = tpu.iota {dimensions = array<i32: 1>} : vector<128x128xi32>
    %8 = vector.broadcast %6 : vector<128x1xi32> to vector<128x128xi32>
    %9 = arith.cmpi eq, %7, %8 : vector<128x128xi32>
    %10 = arith.extui %9 : vector<128x128xi1> to vector<128x128xi32>
    %11 = arith.sitofp %10 : vector<128x128xi32> to vector<128x128xf32>
    %c0_2 = arith.constant 0 : index
    %c0_3 = arith.constant 0 : index
    %12 = vector.load %arg3[%c0_2, %c0_3] : memref<128x50xf32, #tpu.memory_space<vmem>>, vector<128x50xf32>
    %cst = arith.constant dense<0.000000e+00> : vector<128x50xf32>
    %13 = tpu.matmul %11, %12, %cst {dimension_numbers = #tpu.dot_dimension_numbers<[1], [0], [0], [1], [0, 0, 1, 1], [], []>} : vector<128x128xf32>, vector<128x50xf32>, vector<128x50xf32> -> vector<128x50xf32>
    %c0_4 = arith.constant 0 : index
    %c0_5 = arith.constant 0 : index
    %14 = vector.load %arg4[%c0_4, %c0_5] : memref<128x128xf32, #tpu.memory_space<vmem>>, vector<128x50xf32>
    %15 = arith.addf %14, %13 : vector<128x50xf32>
    %c0_6 = arith.constant 0 : index
    %c0_7 = arith.constant 0 : index
    %16 = vector.load %arg4[%c0_6, %c0_7] : memref<128x128xf32, #tpu.memory_space<vmem>>, vector<128x50xf32>
    tpu.vector_store %arg4[%c0_6, %c0_7], %15 {strides = array<i32>} : memref<128x128xf32, #tpu.memory_space<vmem>>, vector<128x50xf32>,
    return
  }
  func.func @transform_0(%arg0: i32, %arg1: i32) -> (i32, i32) {
    %c0_i32 = arith.constant 0 : i32
    %c0_i32_0 = arith.constant 0 : i32
    return %arg0, %c0_i32 : i32, i32
  }
  func.func @transform_1(%arg0: i32, %arg1: i32) -> (i32, i32) {
    %c0_i32 = arith.constant 0 : i32
    %c0_i32_0 = arith.constant 0 : i32
    return %arg1, %c0_i32 : i32, i32
  }
  func.func @transform_2(%arg0: i32, %arg1: i32) -> (i32, i32) {
    %c0_i32 = arith.constant 0 : i32
    %c0_i32_0 = arith.constant 0 : i32
    return %arg0, %c0_i32 : i32, i32
  }
}

</mosaic_0001>

<llo_original>
// kernel: gensim_embedding_forward.1
$region0: #{gensim_embedding_forward.1}
  #allocation0 [shape = 'u32[]', space=smem, size = 0x4, offset = 0x4, fixed_abs, tag = 'smem constant byte address 0x4 - core index']
  #allocation1 [shape = 'u32[144,128]{1,0:T(1,128)}', space=vmem, size = 0x12000, scoped, tag = 'internal scratch']
  %s0 = inlined_call_operand.vmem [shape: s32[128,1], index: 0, kind: input, shape index: {}]
  %s1 = inlined_call_operand.vmem [shape: f32[128,50], index: 1, kind: input, shape index: {}]
  %s2 = inlined_call_operand.vmem [shape: f32[128,128], index: 2, kind: output, shape index: {}]
  %s3 = sld [smem:[#allocation0]]
  $region22: #{gensim_embedding_forward.1} parent=0
    _
  %s5 = ssub.s32 1, %s3
  %s6 = scalar_select 0, %s5, %s3
  // Predicated region
  $region2: #{gensim_embedding_forward.1} parent=0 // pred_check
    _
  $region3: #{gensim_embedding_forward.1} parent=0 // pred_check_branch
    %8 = sbr.rel (0) target = $region5
  $region4: #{gensim_embedding_forward.1} parent=0 // pred_region
    _
  $region5: #{gensim_embedding_forward.1} parent=0 // pred_fallthru
    _
  // Predicated region
  $region6: #{gensim_embedding_forward.1} parent=0 // pred_check
    _
  $region7: #{gensim_embedding_forward.1} parent=0 // pred_check_branch
    %10 = sbr.rel (0) target = $region9
  $region8: #{gensim_embedding_forward.1} parent=0 // pred_region
    _
  $region9: #{gensim_embedding_forward.1} parent=0 // pred_fallthru
    _
  %p11 = scmp.eq.s32.totalorder 0, 0
  // Predicated region
  $region10: #{gensim_embedding_forward.1} parent=0 // pred_check
    %p12 = pneg %p11
  $region11: #{gensim_embedding_forward.1} parent=0 // pred_check_branch
    %14 = sbr.rel (%p12) target = $region13
  $region12: #{gensim_embedding_forward.1} parent=0 // pred_region
    %15 = vst [vmem:[%s2] sm:$0xff] 0.0
    %16 = vst [vmem:[%s2 + $0x8] sm:$0xff] 0.0
    %17 = vst [vmem:[%s2 + $0x10] sm:$0xff] 0.0
    %18 = vst [vmem:[%s2 + $0x18] sm:$0xff] 0.0
    %19 = vst [vmem:[%s2 + $0x20] sm:$0xff] 0.0
    %20 = vst [vmem:[%s2 + $0x28] sm:$0xff] 0.0
    %21 = vst [vmem:[%s2 + $0x30] sm:$0xff] 0.0
    %22 = vst [vmem:[%s2 + $0x38] sm:$0xff] 0.0
    %23 = vst [vmem:[%s2 + $0x40] sm:$0xff] 0.0
    %24 = vst [vmem:[%s2 + $0x48] sm:$0xff] 0.0
    %25 = vst [vmem:[%s2 + $0x50] sm:$0xff] 0.0
    %26 = vst [vmem:[%s2 + $0x58] sm:$0xff] 0.0
    %27 = vst [vmem:[%s2 + $0x60] sm:$0xff] 0.0
    %28 = vst [vmem:[%s2 + $0x68] sm:$0xff] 0.0
    %29 = vst [vmem:[%s2 + $0x70] sm:$0xff] 0.0
    %30 = vst [vmem:[%s2 + $0x78] sm:$0xff] 0.0
  $region13: #{gensim_embedding_forward.1} parent=0 // pred_fallthru
    _
  %v31 = vld [vmem:[%s0] sm:$0xff]
  %v32 = vld [vmem:[%s0 + $0x8] sm:$0xff]
  %v33 = vld [vmem:[%s0 + $0x10] sm:$0xff]
  %v34 = vld [vmem:[%s0 + $0x18] sm:$0xff]
  %v35 = vld [vmem:[%s0 + $0x20] sm:$0xff]
  %v36 = vld [vmem:[%s0 + $0x28] sm:$0xff]
  %v37 = vld [vmem:[%s0 + $0x30] sm:$0xff]
  %v38 = vld [vmem:[%s0 + $0x38] sm:$0xff]
  %v39 = vld [vmem:[%s0 + $0x40] sm:$0xff]
  %v40 = vld [vmem:[%s0 + $0x48] sm:$0xff]
  %v41 = vld [vmem:[%s0 + $0x50] sm:$0xff]
  %v42 = vld [vmem:[%s0 + $0x58] sm:$0xff]
  %v43 = vld [vmem:[%s0 + $0x60] sm:$0xff]
  %v44 = vld [vmem:[%s0 + $0x68] sm:$0xff]
  %v45 = vld [vmem:[%s0 + $0x70] sm:$0xff]
  %v46 = vld [vmem:[%s0 + $0x78] sm:$0xff]
  %s47 = smul.u32 0, 128
  %v48 = vstv %s47
  %v49 = vsub.s32 %v31, %v48
  %v50 = vsub.s32 %v32, %v48
  %v51 = vsub.s32 %v33, %v48
  %v52 = vsub.s32 %v34, %v48
  %v53 = vsub.s32 %v35, %v48
  %v54 = vsub.s32 %v36, %v48
  %v55 = vsub.s32 %v37, %v48
  %v56 = vsub.s32 %v38, %v48
  %v57 = vsub.s32 %v39, %v48
  %v58 = vsub.s32 %v40, %v48
  %v59 = vsub.s32 %v41, %v48
  %v60 = vsub.s32 %v42, %v48
  %v61 = vsub.s32 %v43, %v48
  %v62 = vsub.s32 %v44, %v48
  %v63 = vsub.s32 %v45, %v48
  %v64 = vsub.s32 %v46, %v48
  %v65 = vlaneseq
  %v66 = vand.u32 %v65, 127
  %67 = vset.pattern.permute.xlu0 0
  %68 = vperm.xlu0 %67, %v49
  %v69 = vpop.permute.xlu0 %68
  %70 = vset.pattern.permute.xlu0 0
  %71 = vperm.xlu0 %70, %v50
  %v72 = vpop.permute.xlu0 %71
  %73 = vset.pattern.permute.xlu0 0
  %74 = vperm.xlu0 %73, %v51
  %v75 = vpop.permute.xlu0 %74
  %76 = vset.pattern.permute.xlu0 0
  %77 = vperm.xlu0 %76, %v52
  %v78 = vpop.permute.xlu0 %77
  %79 = vset.pattern.permute.xlu0 0
  %80 = vperm.xlu0 %79, %v53
  %v81 = vpop.permute.xlu0 %80
  %82 = vset.pattern.permute.xlu0 0
  %83 = vperm.xlu0 %82, %v54
  %v84 = vpop.permute.xlu0 %83
  %85 = vset.pattern.permute.xlu0 0
  %86 = vperm.xlu0 %85, %v55
  %v87 = vpop.permute.xlu0 %86
  %88 = vset.pattern.permute.xlu0 0
  %89 = vperm.xlu0 %88, %v56
  %v90 = vpop.permute.xlu0 %89
  %91 = vset.pattern.permute.xlu0 0
  %92 = vperm.xlu0 %91, %v57
  %v93 = vpop.permute.xlu0 %92
  %94 = vset.pattern.permute.xlu0 0
  %95 = vperm.xlu0 %94, %v58
  %v96 = vpop.permute.xlu0 %95
  %97 = vset.pattern.permute.xlu0 0
  %98 = vperm.xlu0 %97, %v59
  %v99 = vpop.permute.xlu0 %98
  %100 = vset.pattern.permute.xlu0 0
  %101 = vperm.xlu0 %100, %v60
  %v102 = vpop.permute.xlu0 %101
  %103 = vset.pattern.permute.xlu0 0
  %104 = vperm.xlu0 %103, %v61
  %v105 = vpop.permute.xlu0 %104
  %106 = vset.pattern.permute.xlu0 0
  %107 = vperm.xlu0 %106, %v62
  %v108 = vpop.permute.xlu0 %107
  %109 = vset.pattern.permute.xlu0 0
  %110 = vperm.xlu0 %109, %v63
  %v111 = vpop.permute.xlu0 %110
  %112 = vset.pattern.permute.xlu0 0
  %113 = vperm.xlu0 %112, %v64
  %v114 = vpop.permute.xlu0 %113
  %vm115 = vcmp.eq.s32.totalorder %v66, %v69
  %vm116 = vcmp.eq.s32.totalorder %v66, %v72
  %vm117 = vcmp.eq.s32.totalorder %v66, %v75
  %vm118 = vcmp.eq.s32.totalorder %v66, %v78
  %vm119 = vcmp.eq.s32.totalorder %v66, %v81
  %vm120 = vcmp.eq.s32.totalorder %v66, %v84
  %vm121 = vcmp.eq.s32.totalorder %v66, %v87
  %vm122 = vcmp.eq.s32.totalorder %v66, %v90
  %vm123 = vcmp.eq.s32.totalorder %v66, %v93
  %vm124 = vcmp.eq.s32.totalorder %v66, %v96
  %vm125 = vcmp.eq.s32.totalorder %v66, %v99
  %vm126 = vcmp.eq.s32.totalorder %v66, %v102
  %vm127 = vcmp.eq.s32.totalorder %v66, %v105
  %vm128 = vcmp.eq.s32.totalorder %v66, %v108
  %vm129 = vcmp.eq.s32.totalorder %v66, %v111
  %vm130 = vcmp.eq.s32.totalorder %v66, %v114
  %v131 = vsel %vm115, 1, 0
  %v132 = vsel %vm116, 1, 0
  %v133 = vsel %vm117, 1, 0
  %v134 = vsel %vm118, 1, 0
  %v135 = vsel %vm119, 1, 0
  %v136 = vsel %vm120, 1, 0
  %v137 = vsel %vm121, 1, 0
  %v138 = vsel %vm122, 1, 0
  %v139 = vsel %vm123, 1, 0
  %v140 = vsel %vm124, 1, 0
  %v141 = vsel %vm125, 1, 0
  %v142 = vsel %vm126, 1, 0
  %v143 = vsel %vm127, 1, 0
  %v144 = vsel %vm128, 1, 0
  %v145 = vsel %vm129, 1, 0
  %v146 = vsel %vm130, 1, 0
  %v147 = vcvt.s32.f32 %v131
  %v148 = vcvt.s32.f32 %v132
  %v149 = vcvt.s32.f32 %v133
  %v150 = vcvt.s32.f32 %v134
  %v151 = vcvt.s32.f32 %v135
  %v152 = vcvt.s32.f32 %v136
  %v153 = vcvt.s32.f32 %v137
  %v154 = vcvt.s32.f32 %v138
  %v155 = vcvt.s32.f32 %v139
  %v156 = vcvt.s32.f32 %v140
  %v157 = vcvt.s32.f32 %v141
  %v158 = vcvt.s32.f32 %v142
  %v159 = vcvt.s32.f32 %v143
  %v160 = vcvt.s32.f32 %v144
  %v161 = vcvt.s32.f32 %v145
  %v162 = vcvt.s32.f32 %v146
  %v163 = vld [vmem:[%s1] sm:$0xff]
  %v164 = vld [vmem:[%s1 + $0x8] sm:$0xff]
  %v165 = vld [vmem:[%s1 + $0x10] sm:$0xff]
  %v166 = vld [vmem:[%s1 + $0x18] sm:$0xff]
  %v167 = vld [vmem:[%s1 + $0x20] sm:$0xff]
  %v168 = vld [vmem:[%s1 + $0x28] sm:$0xff]
  %v169 = vld [vmem:[%s1 + $0x30] sm:$0xff]
  %v170 = vld [vmem:[%s1 + $0x38] sm:$0xff]
  %v171 = vld [vmem:[%s1 + $0x40] sm:$0xff]
  %v172 = vld [vmem:[%s1 + $0x48] sm:$0xff]
  %v173 = vld [vmem:[%s1 + $0x50] sm:$0xff]
  %v174 = vld [vmem:[%s1 + $0x58] sm:$0xff]
  %v175 = vld [vmem:[%s1 + $0x60] sm:$0xff]
  %v176 = vld [vmem:[%s1 + $0x68] sm:$0xff]
  %v177 = vld [vmem:[%s1 + $0x70] sm:$0xff]
  %v178 = vld [vmem:[%s1 + $0x78] sm:$0xff]
  %179 = vmatprep.subr.mxu0 0.0
  %180 = vmatpush1.msra.mxu0 %v178
  %181 = vmatprep.subr.mxu0 0.0
  %182 = vmatpush1.msra.mxu0 %v177
  %183 = vmatprep.subr.mxu0 0.0
  %184 = vmatpush1.msra.mxu0 %v176
  %185 = vmatprep.subr.mxu0 0.0
  %186 = vmatpush1.msra.mxu0 %v175
  %187 = vmatprep.subr.mxu0 0.0
  %188 = vmatpush1.msra.mxu0 %v174
  %189 = vmatprep.subr.mxu0 0.0
  %190 = vmatpush1.msra.mxu0 %v173
  %191 = vmatprep.subr.mxu0 0.0
  %192 = vmatpush1.msra.mxu0 %v172
  %193 = vmatprep.subr.mxu0 0.0
  %194 = vmatpush1.msra.mxu0 %v171
  %195 = vmatprep.subr.mxu0 0.0
  %196 = vmatpush1.msra.mxu0 %v170
  %197 = vmatprep.subr.mxu0 0.0
  %198 = vmatpush1.msra.mxu0 %v169
  %199 = vmatprep.subr.mxu0 0.0
  %200 = vmatpush1.msra.mxu0 %v168
  %201 = vmatprep.subr.mxu0 0.0
  %202 = vmatpush1.msra.mxu0 %v167
  %203 = vmatprep.subr.mxu0 0.0
  %204 = vmatpush1.msra.mxu0 %v166
  %205 = vmatprep.subr.mxu0 0.0
  %206 = vmatpush1.msra.mxu0 %v165
  %207 = vmatprep.subr.mxu0 0.0
  %208 = vmatpush1.msra.mxu0 %v164
  %209 = vmatprep.subr.mxu0 0.0
  %210 = vmatpush1.msra.mxu0 %v163
  %211 = vmatprep.subr.mxu0 0.0
  %212 = vmatpush2.msra.mxu0 0.0
  %213 = vmatprep.subr.mxu0 0.0
  %214 = vmatpush2.msra.mxu0 0.0
  %215 = vmatprep.subr.mxu0 0.0
  %216 = vmatpush2.msra.mxu0 0.0
  %217 = vmatprep.subr.mxu0 0.0
  %218 = vmatpush2.msra.mxu0 0.0
  %219 = vmatprep.subr.mxu0 0.0
  %220 = vmatpush2.msra.mxu0 0.0
  %221 = vmatprep.subr.mxu0 0.0
  %222 = vmatpush2.msra.mxu0 0.0
  %223 = vmatprep.subr.mxu0 0.0
  %224 = vmatpush2.msra.mxu0 0.0
  %225 = vmatprep.subr.mxu0 0.0
  %226 = vmatpush2.msra.mxu0 0.0
  %227 = vmatprep.subr.mxu0 0.0
  %228 = vmatpush2.msra.mxu0 0.0
  %229 = vmatprep.subr.mxu0 0.0
  %230 = vmatpush2.msra.mxu0 0.0
  %231 = vmatprep.subr.mxu0 0.0
  %232 = vmatpush2.msra.mxu0 0.0
  %233 = vmatprep.subr.mxu0 0.0
  %234 = vmatpush2.msra.mxu0 0.0
  %235 = vmatprep.subr.mxu0 0.0
  %236 = vmatpush2.msra.mxu0 0.0
  %237 = vmatprep.subr.mxu0 0.0
  %238 = vmatpush2.msra.mxu0 0.0
  %239 = vmatprep.subr.mxu0 0.0
  %240 = vmatpush2.msra.mxu0 0.0
  %241 = vmatprep.subr.mxu0 0.0
  %242 = vmatpush2.msra.mxu0 0.0
  %243 = vmatprep.mubr.f32.mxu0 0.0
  %244 = vmatmul.mubr.f32.gmra.mxu0 %v147
  %v245 = vpop.f32.mrf.mxu0
  %v246 = vadd.f32 0.0, %v245
  %v247 = vpop.f32.mrf.mxu0
  %248 = vmatprep.mubr.f32.mxu0 0.0
  %249 = vmatmul.mubr.f32.gmra.mxu0 %v148
  %v250 = vpop.f32.mrf.mxu0
  %v251 = vadd.f32 0.0, %v250
  %v252 = vpop.f32.mrf.mxu0
  %253 = vmatprep.mubr.f32.mxu0 0.0
  %254 = vmatmul.mubr.f32.gmra.mxu0 %v149
  %v255 = vpop.f32.mrf.mxu0
  %v256 = vadd.f32 0.0, %v255
  %v257 = vpop.f32.mrf.mxu0
  %258 = vmatprep.mubr.f32.mxu0 0.0
  %259 = vmatmul.mubr.f32.gmra.mxu0 %v150
  %v260 = vpop.f32.mrf.mxu0
  %v261 = vadd.f32 0.0, %v260
  %v262 = vpop.f32.mrf.mxu0
  %263 = vmatprep.mubr.f32.mxu0 0.0
  %264 = vmatmul.mubr.f32.gmra.mxu0 %v151
  %v265 = vpop.f32.mrf.mxu0
  %v266 = vadd.f32 0.0, %v265
  %v267 = vpop.f32.mrf.mxu0
  %268 = vmatprep.mubr.f32.mxu0 0.0
  %269 = vmatmul.mubr.f32.gmra.mxu0 %v152
  %v270 = vpop.f32.mrf.mxu0
  %v271 = vadd.f32 0.0, %v270
  %v272 = vpop.f32.mrf.mxu0
  %273 = vmatprep.mubr.f32.mxu0 0.0
  %274 = vmatmul.mubr.f32.gmra.mxu0 %v153
  %v275 = vpop.f32.mrf.mxu0
  %v276 = vadd.f32 0.0, %v275
  %v277 = vpop.f32.mrf.mxu0
  %278 = vmatprep.mubr.f32.mxu0 0.0
  %279 = vmatmul.mubr.f32.gmra.mxu0 %v154
  %v280 = vpop.f32.mrf.mxu0
  %v281 = vadd.f32 0.0, %v280
  %v282 = vpop.f32.mrf.mxu0
  %283 = vmatprep.mubr.f32.mxu0 0.0
  %284 = vmatmul.mubr.f32.gmra.mxu0 %v155
  %v285 = vpop.f32.mrf.mxu0
  %v286 = vadd.f32 0.0, %v285
  %v287 = vpop.f32.mrf.mxu0
  %288 = vmatprep.mubr.f32.mxu0 0.0
  %289 = vmatmul.mubr.f32.gmra.mxu0 %v156
  %v290 = vpop.f32.mrf.mxu0
  %v291 = vadd.f32 0.0, %v290
  %v292 = vpop.f32.mrf.mxu0
  %293 = vmatprep.mubr.f32.mxu0 0.0
  %294 = vmatmul.mubr.f32.gmra.mxu0 %v157
  %v295 = vpop.f32.mrf.mxu0
  %v296 = vadd.f32 0.0, %v295
  %v297 = vpop.f32.mrf.mxu0
  %298 = vmatprep.mubr.f32.mxu0 0.0
  %299 = vmatmul.mubr.f32.gmra.mxu0 %v158
  %v300 = vpop.f32.mrf.mxu0
  %v301 = vadd.f32 0.0, %v300
  %v302 = vpop.f32.mrf.mxu0
  %303 = vmatprep.mubr.f32.mxu0 0.0
  %304 = vmatmul.mubr.f32.gmra.mxu0 %v159
  %v305 = vpop.f32.mrf.mxu0
  %v306 = vadd.f32 0.0, %v305
  %v307 = vpop.f32.mrf.mxu0
  %308 = vmatprep.mubr.f32.mxu0 0.0
  %309 = vmatmul.mubr.f32.gmra.mxu0 %v160
  %v310 = vpop.f32.mrf.mxu0
  %v311 = vadd.f32 0.0, %v310
  %v312 = vpop.f32.mrf.mxu0
  %313 = vmatprep.mubr.f32.mxu0 0.0
  %314 = vmatmul.mubr.f32.gmra.mxu0 %v161
  %v315 = vpop.f32.mrf.mxu0
  %v316 = vadd.f32 0.0, %v315
  %v317 = vpop.f32.mrf.mxu0
  %318 = vmatprep.mubr.f32.mxu0 0.0
  %319 = vmatmul.mubr.f32.gmra.mxu0 %v162
  %v320 = vpop.f32.mrf.mxu0
  %v321 = vadd.f32 0.0, %v320
  %v322 = vpop.f32.mrf.mxu0
  %323 = vdwg.mxu0
  %v324 = vld [vmem:[%s2] sm:$0xff]
  %v325 = vld [vmem:[%s2 + $0x8] sm:$0xff]
  %v326 = vld [vmem:[%s2 + $0x10] sm:$0xff]
  %v327 = vld [vmem:[%s2 + $0x18] sm:$0xff]
  %v328 = vld [vmem:[%s2 + $0x20] sm:$0xff]
  %v329 = vld [vmem:[%s2 + $0x28] sm:$0xff]
  %v330 = vld [vmem:[%s2 + $0x30] sm:$0xff]
  %v331 = vld [vmem:[%s2 + $0x38] sm:$0xff]
  %v332 = vld [vmem:[%s2 + $0x40] sm:$0xff]
  %v333 = vld [vmem:[%s2 + $0x48] sm:$0xff]
  %v334 = vld [vmem:[%s2 + $0x50] sm:$0xff]
  %v335 = vld [vmem:[%s2 + $0x58] sm:$0xff]
  %v336 = vld [vmem:[%s2 + $0x60] sm:$0xff]
  %v337 = vld [vmem:[%s2 + $0x68] sm:$0xff]
  %v338 = vld [vmem:[%s2 + $0x70] sm:$0xff]
  %v339 = vld [vmem:[%s2 + $0x78] sm:$0xff]
  %v340 = vadd.f32 %v324, %v246
  %v341 = vadd.f32 %v325, %v251
  %v342 = vadd.f32 %v326, %v256
  %v343 = vadd.f32 %v327, %v261
  %v344 = vadd.f32 %v328, %v266
  %v345 = vadd.f32 %v329, %v271
  %v346 = vadd.f32 %v330, %v276
  %v347 = vadd.f32 %v331, %v281
  %v348 = vadd.f32 %v332, %v286
  %v349 = vadd.f32 %v333, %v291
  %v350 = vadd.f32 %v334, %v296
  %v351 = vadd.f32 %v335, %v301
  %v352 = vadd.f32 %v336, %v306
  %v353 = vadd.f32 %v337, %v311
  %v354 = vadd.f32 %v338, %v316
  %v355 = vadd.f32 %v339, %v321
  %vm356 = vcmask 408576
  %357 = vst.msk [vmem:[%s2] sm:$0xff] %vm356, %v340
  %358 = vst.msk [vmem:[%s2 + $0x8] sm:$0xff] %vm356, %v341
  %359 = vst.msk [vmem:[%s2 + $0x10] sm:$0xff] %vm356, %v342
  %360 = vst.msk [vmem:[%s2 + $0x18] sm:$0xff] %vm356, %v343
  %361 = vst.msk [vmem:[%s2 + $0x20] sm:$0xff] %vm356, %v344
  %362 = vst.msk [vmem:[%s2 + $0x28] sm:$0xff] %vm356, %v345
  %363 = vst.msk [vmem:[%s2 + $0x30] sm:$0xff] %vm356, %v346
  %364 = vst.msk [vmem:[%s2 + $0x38] sm:$0xff] %vm356, %v347
  %365 = vst.msk [vmem:[%s2 + $0x40] sm:$0xff] %vm356, %v348
  %366 = vst.msk [vmem:[%s2 + $0x48] sm:$0xff] %vm356, %v349
  %367 = vst.msk [vmem:[%s2 + $0x50] sm:$0xff] %vm356, %v350
  %368 = vst.msk [vmem:[%s2 + $0x58] sm:$0xff] %vm356, %v351
  %369 = vst.msk [vmem:[%s2 + $0x60] sm:$0xff] %vm356, %v352
  %370 = vst.msk [vmem:[%s2 + $0x68] sm:$0xff] %vm356, %v353
  %371 = vst.msk [vmem:[%s2 + $0x70] sm:$0xff] %vm356, %v354
  %372 = vst.msk [vmem:[%s2 + $0x78] sm:$0xff] %vm356, %v355
  // Predicated region
  $region14: #{gensim_embedding_forward.1} parent=0 // pred_check
    _
  $region15: #{gensim_embedding_forward.1} parent=0 // pred_check_branch
    %374 = sbr.rel (0) target = $region17
  $region16: #{gensim_embedding_forward.1} parent=0 // pred_region
    _
  $region17: #{gensim_embedding_forward.1} parent=0 // pred_fallthru
    _
  // Predicated region
  $region18: #{gensim_embedding_forward.1} parent=0 // pred_check
    _
  $region19: #{gensim_embedding_forward.1} parent=0 // pred_check_branch
    %376 = sbr.rel (0) target = $region21
  $region20: #{gensim_embedding_forward.1} parent=0 // pred_region
    _
  $region21: #{gensim_embedding_forward.1} parent=0 // pred_fallthru
    _

</llo_original>
